<compile_context>
chip_gen: v5e
topology: v5e:2x2
jax: 0.10.0
libtpu: 0.0.40
codegen_flags: <defaults>
</compile_context>

<pallas_src>
import jax
import jax.numpy as jnp
from jax import lax
from jax.experimental import pallas as pl
from jax.experimental.pallas import tpu as pltpu

# AvgPool2d hyper-parameters from the module.
KH, KW = 6, 8
SH, SW = 2, 2
PH, PW = 3, 4

_LANES = 128
_SUBLANES = 8


def _round_up(v, m):
    return -(-v // m) * m


def _band_matrix(out_dim, in_dim, k, s, p):
    """(out_dim, in_dim) 0/1 matrix: M[o, i] = 1 iff input index i lies in the
    pooling window of output index o (window start s*o - p, length k).
    Encodes kernel window + stride + zero padding in one matrix."""
    o = lax.broadcasted_iota(jnp.int32, (out_dim, in_dim), 0)
    i = lax.broadcasted_iota(jnp.int32, (out_dim, in_dim), 1)
    start = s * o - p
    return ((i >= start) & (i < start + k)).astype(jnp.float32)


def _pipeline_vmem_bytes(ncb, H, W, Ho, Wo):
    """Approximate double-buffered VMEM pipeline footprint of one grid step,
    padded to the (8, 128) register tile."""
    xb = _round_up(ncb * H, _SUBLANES) * _round_up(W, _LANES) * 4
    ob = _round_up(ncb * Ho, _SUBLANES) * _round_up(Wo, _LANES) * 4
    bw = _round_up(W, _SUBLANES) * _round_up(Wo, _LANES) * 4
    bh = _round_up(ncb * Ho, _SUBLANES) * _round_up(ncb * H, _LANES) * 4
    return 2 * (xb + ob + bw + bh)


def _choose_plane_block(NC, H, W, Ho, Wo):
    """Planes per grid step: largest divisor of NC whose pipeline footprint
    fits a v7x-safe VMEM budget; prefer >=2 grid steps (v7x has two
    TensorCores) when that does not force pathologically small blocks."""
    budget = 24 << 20
    divisors = [d for d in range(1, NC + 1) if NC % d == 0]
    fitting = [d for d in divisors
               if _pipeline_vmem_bytes(d, H, W, Ho, Wo) <= budget]
    if not fitting:
        return 1
    best = max(fitting)
    if NC // best == 1:
        multi = [d for d in fitting if 2 <= NC // d <= 8]
        if multi:
            best = max(multi)
    return best


def _avgpool_kernel(x_ref, bw_ref, bhd_ref, out_ref):
    """Average-pool one block of NCb planes.

    x_ref:   (NCb*H, W)       input planes stacked along rows (native layout).
    bw_ref:  (W, Wo)          0/1 column-window matrix (stride + pad encoded).
    bhd_ref: (NCb*Ho, NCb*H)  block-diagonal I_NCb (x) Bh row-window matrix.
    out_ref: (NCb*Ho, Wo)
    """
    # Row pass: sum the KW window columns of every input row (MXU).
    rowsum = jnp.dot(x_ref[...], bw_ref[...],
                     preferred_element_type=jnp.float32,
                     precision=lax.Precision.HIGHEST)
    # Column pass: sum the KH window rows, independently per plane (MXU).
    win = jnp.dot(bhd_ref[...], rowsum,
                  preferred_element_type=jnp.float32,
                  precision=lax.Precision.HIGHEST)
    # count_include_pad=True => divisor is always KH*KW.  Single bulk store.
    out_ref[...] = win * jnp.float32(1.0 / (KH * KW))


@jax.jit
def avg_pool2d(x):
    """x: (N, C, H, W) float32 -> (N, C, Ho, Wo) float32 (AvgPool2d as above)."""
    N, C, H, W = x.shape
    Ho = (H + 2 * PH - KH) // SH + 1       # ceil_mode=False -> floor
    Wo = (W + 2 * PW - KW) // SW + 1
    NC = N * C

    NCb = _choose_plane_block(NC, H, W, Ho, Wo)
    G = NC // NCb

    # Native layout, zero extra HBM passes: (N,C,H,W) -> (G, NCb*H, W) reshape.
    x_blocks = x.reshape(G, NCb * H, W)

    # Tiny shape-only window matrices (constant-folded by XLA).
    bh = _band_matrix(Ho, H, KH, SH, PH)                    # (Ho, H)
    bw = _band_matrix(Wo, W, KW, SW, PW).T                  # (W, Wo)
    bhd = jnp.kron(jnp.eye(NCb, dtype=jnp.float32), bh)     # (NCb*Ho, NCb*H)

    foot = _pipeline_vmem_bytes(NCb, H, W, Ho, Wo)
    try:
        vmem_cap = int(pltpu.get_tpu_info().vmem_capacity_bytes * 3 // 4)
    except Exception:
        vmem_cap = 48 << 20                                 # v7x-safe fallback
    vmem_limit = int(min(vmem_cap, max(2 * foot, 8 << 20)))

    cost = pl.CostEstimate(
        flops=int(2 * G * (NCb * H * W * Wo + (NCb * Ho) * (NCb * H) * Wo)),
        transcendentals=0,
        bytes_accessed=int(4 * (NC * H * W + NC * Ho * Wo
                                + W * Wo + (NCb * Ho) * (NCb * H))),
    )

    out = pl.pallas_call(
        _avgpool_kernel,
        out_shape=jax.ShapeDtypeStruct((G, NCb * Ho, Wo), jnp.float32),
        grid=(G,),
        in_specs=[
            pl.BlockSpec((None, NCb * H, W), lambda g: (g, 0, 0)),
            pl.BlockSpec((W, Wo), lambda g: (0, 0)),
            pl.BlockSpec((NCb * Ho, NCb * H), lambda g: (0, 0)),
        ],
        out_specs=pl.BlockSpec((None, NCb * Ho, Wo), lambda g: (g, 0, 0)),
        compiler_params=pltpu.CompilerParams(
            dimension_semantics=("parallel",),
            vmem_limit_bytes=vmem_limit,
        ),
        cost_estimate=cost,
    )(x_blocks, bw, bhd)

    # Still native layout: (G, NCb*Ho, Wo) -> (N, C, Ho, Wo), no copy.
    return out.reshape(N, C, Ho, Wo)


if __name__ == "__main__":
    key = jax.random.PRNGKey(0)
    N, C, H, W = 2, 4, 16, 16
    x = jax.random.normal(key, (N, C, H, W), dtype=jnp.float32)

    y = jax.block_until_ready(avg_pool2d(x))

    # Reference: zero-padded window sums / (KH*KW) via reduce_window.
    xp_ref = jnp.pad(x, ((0, 0), (0, 0), (PH, PH), (PW, PW)))
    ref = lax.reduce_window(xp_ref, 0.0, lax.add,
                            (1, 1, KH, KW), (1, 1, SH, SW), "VALID") / (KH * KW)

    Ho = (H + 2 * PH - KH) // SH + 1
    Wo = (W + 2 * PW - KW) // SW + 1
    assert y.shape == ref.shape == (N, C, Ho, Wo), (y.shape, ref.shape)
    assert jnp.allclose(y, ref, rtol=1e-5, atol=1e-5), "avg-pool values mismatch"

    print("KERNEL_OK")
</pallas_src>

<mosaic_0001>
module attributes {stable_mosaic.version = 11 : i64} {
  func.func @_avgpool_kernel(%arg0: i32, %arg1: memref<1x64x16xf32, #tpu.memory_space<vmem>>, %arg2: memref<16x9xf32, #tpu.memory_space<vmem>>, %arg3: memref<36x64xf32, #tpu.memory_space<vmem>>, %arg4: memref<1x36x9xf32, #tpu.memory_space<vmem>>) attributes {dimension_semantics = [#tpu.dimension_semantics<parallel>], iteration_bounds = array<i64: 2>, scalar_prefetch = 0 : i64, scratch_operands = 0 : i64, tpu.core_type = #tpu.core_type<tc>, window_params = [{transform_indices = @transform_0, window_bounds = array<i64: 1, 64, 16>}, {pipeline_mode = #tpu.pipeline_mode<synchronous>, transform_indices = @transform_1, window_bounds = array<i64: 16, 9>}, {pipeline_mode = #tpu.pipeline_mode<synchronous>, transform_indices = @transform_2, window_bounds = array<i64: 36, 64>}, {transform_indices = @transform_3, window_bounds = array<i64: 1, 36, 9>}]} {
    %c0 = arith.constant 0 : index
    %c0_0 = arith.constant 0 : index
    %c0_1 = arith.constant 0 : index
    %0 = vector.load %arg1[%c0, %c0_0, %c0_1] : memref<1x64x16xf32, #tpu.memory_space<vmem>>, vector<1x64x16xf32>
    %1 = vector.shape_cast %0 : vector<1x64x16xf32> to vector<64x16xf32>
    %c0_2 = arith.constant 0 : index
    %c0_3 = arith.constant 0 : index
    %2 = vector.load %arg2[%c0_2, %c0_3] : memref<16x9xf32, #tpu.memory_space<vmem>>, vector<16x9xf32>
    %cst = arith.constant dense<0.000000e+00> : vector<64x9xf32>
    %3 = tpu.matmul %1, %2, %cst {dimension_numbers = #tpu.dot_dimension_numbers<[1], [0], [0], [1], [0, 0, 1, 1], [], []>, precision = #tpu.contract_precision<fp32>} : vector<64x16xf32>, vector<16x9xf32>, vector<64x9xf32> -> vector<64x9xf32>
    %c0_4 = arith.constant 0 : index
    %c0_5 = arith.constant 0 : index
    %4 = vector.load %arg3[%c0_4, %c0_5] : memref<36x64xf32, #tpu.memory_space<vmem>>, vector<36x64xf32>
    %cst_6 = arith.constant dense<0.000000e+00> : vector<36x9xf32>
    %5 = tpu.matmul %4, %3, %cst_6 {dimension_numbers = #tpu.dot_dimension_numbers<[1], [0], [0], [1], [0, 0, 1, 1], [], []>, precision = #tpu.contract_precision<fp32>} : vector<36x64xf32>, vector<64x9xf32>, vector<36x9xf32> -> vector<36x9xf32>
    %cst_7 = arith.constant 0.020833334 : f32
    %6 = vector.broadcast %cst_7 : f32 to vector<36x9xf32>
    %7 = arith.mulf %5, %6 : vector<36x9xf32>
    %c0_8 = arith.constant 0 : index
    %c0_9 = arith.constant 0 : index
    %c0_10 = arith.constant 0 : index
    %8 = vector.load %arg4[%c0_8, %c0_9, %c0_10] : memref<1x36x9xf32, #tpu.memory_space<vmem>>, vector<1x36x9xf32>
    %9 = vector.shape_cast %8 : vector<1x36x9xf32> to vector<36x9xf32>
    %10 = vector.shape_cast %7 : vector<36x9xf32> to vector<1x36x9xf32>
    tpu.vector_store %arg4[%c0_8, %c0_9, %c0_10], %10 {strides = array<i32>} : memref<1x36x9xf32, #tpu.memory_space<vmem>>, vector<1x36x9xf32>,
    return
  }
  func.func @transform_0(%arg0: i32) -> (i32, i32, i32) {
    %c0_i32 = arith.constant 0 : i32
    %c0_i32_0 = arith.constant 0 : i32
    %c0_i32_1 = arith.constant 0 : i32
    return %arg0, %c0_i32, %c0_i32_0 : i32, i32, i32
  }
  func.func @transform_1(%arg0: i32) -> (i32, i32) {
    %c0_i32 = arith.constant 0 : i32
    %c0_i32_0 = arith.constant 0 : i32
    %c0_i32_1 = arith.constant 0 : i32
    return %c0_i32, %c0_i32_0 : i32, i32
  }
  func.func @transform_2(%arg0: i32) -> (i32, i32) {
    %c0_i32 = arith.constant 0 : i32
    %c0_i32_0 = arith.constant 0 : i32
    %c0_i32_1 = arith.constant 0 : i32
    return %c0_i32, %c0_i32_0 : i32, i32
  }
  func.func @transform_3(%arg0: i32) -> (i32, i32, i32) {
    %c0_i32 = arith.constant 0 : i32
    %c0_i32_0 = arith.constant 0 : i32
    %c0_i32_1 = arith.constant 0 : i32
    return %arg0, %c0_i32, %c0_i32_0 : i32, i32, i32
  }
}

</mosaic_0001>

<llo_original>
// kernel: avg_pool2d.1
$region0: #{avg_pool2d.1}
  #allocation0 [shape = 'u32[]', space=smem, size = 0x4, offset = 0x4, fixed_abs, tag = 'smem constant byte address 0x4 - core index']
  #allocation1 [shape = 'u32[72,128]{1,0:T(1,128)}', space=vmem, size = 0x9000, scoped, tag = 'internal scratch']
  %s0 = inlined_call_operand.vmem [shape: f32[2,64,16], index: 0, kind: input, shape index: {}]
  %s1 = inlined_call_operand.vmem [shape: f32[16,9], index: 1, kind: input, shape index: {}]
  %s2 = inlined_call_operand.vmem [shape: f32[36,64], index: 2, kind: input, shape index: {}]
  %s3 = inlined_call_operand.vmem [shape: f32[2,36,9], index: 3, kind: output, shape index: {}]
  %s4 = sld [smem:[#allocation0]]
  $region45: #{avg_pool2d.1} parent=0
    _
  %s6 = ssub.s32 1, %s4
  %s7 = scalar_select 0, %s6, %s4
  loop: start=0, step=1, limit=4
  $region2: #{avg_pool2d.1} parent=0 // loop_pre_header
    _
  $region3: #{avg_pool2d.1} parent=0 // loop_header
    %s9 = sphi 0, %s13
    %p10 = scmp.ge.s32.totalorder %s9, 4
    %s19 = sphi 0, %s21
    %s22 = sphi 0, %s19
    %s23 = sphi 0, %s22
    %s39 = sphi 0, %s23
    %s43 = sphi 0, %s43
    %s45 = sphi 0, %s43
    %s46 = sphi 0, %s45
    %s60 = sphi 0, %s46
    %s64 = sphi 0, %s64
    %s66 = sphi 0, %s64
    %s67 = sphi 0, %s66
    %s81 = sphi 0, %s67
    %s87 = sphi 0, %s89
    %s90 = sphi 0, %s87
    %s91 = sphi 0, %s90
    %s107 = sphi 0, %s91
  $region4: #{avg_pool2d.1} parent=0 // loop_header_branch
    %12 = sbr.rel (%p10) target = $region8
  $region5: #{avg_pool2d.1} parent=0 // loop_body
    %s14 = ssub.s32 %s9, 1
    %s15 = ssub.s32 %s9, 2
    %s16 = sadd.s32 %s9, 1
    %s17 = ssub.s32 %s9, %s16
    %p18 = scmp.eq.s32.totalorder %s17, 0
    %s20 = sadd.s32 %s19, 1
    %s21 = scalar_select %p18, %s19, %s20
    %p24 = pneg %p18
    %p25 = scmp.eq.s32.totalorder %s9, 1
    %p26 = por %p24, %p25
    %p27 = scmp.ne.s32.totalorder %s19, %s22
    %p28 = scmp.eq.s32.totalorder %s9, 0
    %p29 = por %p27, %p28
    %p30 = scmp.ne.s32.totalorder %s19, %s22
    %p31 = scmp.eq.s32.totalorder %s14, 1
    %p32 = por %p30, %p31
    %p33 = scmp.ne.s32.totalorder %s22, %s23
    %p34 = scmp.eq.s32.totalorder %s14, 0
    %p35 = por %p33, %p34
    %p36 = scmp.ne.s32.totalorder %s22, %s23
    %p37 = scmp.eq.s32.totalorder %s15, 1
    %p38 = por %p36, %p37
    %p40 = scmp.ne.s32.totalorder %s23, %s39
    %p41 = scmp.eq.s32.totalorder %s15, 0
    %p42 = por %p40, %p41
    %s44 = sadd.s32 %s43, 1
    %p47 = scmp.eq.s32.totalorder %s9, 1
    %p48 = scmp.ne.s32.totalorder %s43, %s45
    %p49 = scmp.eq.s32.totalorder %s9, 0
    %p50 = por %p48, %p49
    %p51 = scmp.ne.s32.totalorder %s43, %s45
    %p52 = scmp.eq.s32.totalorder %s14, 1
    %p53 = por %p51, %p52
    %p54 = scmp.ne.s32.totalorder %s45, %s46
    %p55 = scmp.eq.s32.totalorder %s14, 0
    %p56 = por %p54, %p55
    %p57 = scmp.ne.s32.totalorder %s45, %s46
    %p58 = scmp.eq.s32.totalorder %s15, 1
    %p59 = por %p57, %p58
    %p61 = scmp.ne.s32.totalorder %s46, %s60
    %p62 = scmp.eq.s32.totalorder %s15, 0
    %p63 = por %p61, %p62
    %s65 = sadd.s32 %s64, 1
    %p68 = scmp.eq.s32.totalorder %s9, 1
    %p69 = scmp.ne.s32.totalorder %s64, %s66
    %p70 = scmp.eq.s32.totalorder %s9, 0
    %p71 = por %p69, %p70
    %p72 = scmp.ne.s32.totalorder %s64, %s66
    %p73 = scmp.eq.s32.totalorder %s14, 1
    %p74 = por %p72, %p73
    %p75 = scmp.ne.s32.totalorder %s66, %s67
    %p76 = scmp.eq.s32.totalorder %s14, 0
    %p77 = por %p75, %p76
    %p78 = scmp.ne.s32.totalorder %s66, %s67
    %p79 = scmp.eq.s32.totalorder %s15, 1
    %p80 = por %p78, %p79
    %p82 = scmp.ne.s32.totalorder %s67, %s81
    %p83 = scmp.eq.s32.totalorder %s15, 0
    %p84 = por %p82, %p83
    %s85 = ssub.s32 %s9, %s16
    %p86 = scmp.eq.s32.totalorder %s85, 0
    %s88 = sadd.s32 %s87, 1
    %s89 = scalar_select %p86, %s87, %s88
    %p92 = pneg %p86
    %p93 = scmp.eq.s32.totalorder %s9, 1
    %p94 = por %p92, %p93
    %p95 = scmp.ne.s32.totalorder %s87, %s90
    %p96 = scmp.eq.s32.totalorder %s9, 0
    %p97 = por %p95, %p96
    %p98 = scmp.ne.s32.totalorder %s87, %s90
    %p99 = scmp.eq.s32.totalorder %s14, 1
    %p100 = por %p98, %p99
    %p101 = scmp.ne.s32.totalorder %s90, %s91
    %p102 = scmp.eq.s32.totalorder %s14, 0
    %p103 = por %p101, %p102
    %p104 = scmp.ne.s32.totalorder %s90, %s91
    %p105 = scmp.eq.s32.totalorder %s15, 1
    %p106 = por %p104, %p105
    %p108 = scmp.ne.s32.totalorder %s91, %s107
    %p109 = scmp.eq.s32.totalorder %s15, 0
    %p110 = por %p108, %p109
    %p111 = scmp.le.s32.totalorder 1, %s9
    %p112 = scmp.lt.s32.totalorder %s9, 3
    %p113 = pnand %p111, %p112
    %p114 = pneg %p113
    // Predicated region
    $region9: #{avg_pool2d.1} parent=5 // pred_check
      _
    $region10: #{avg_pool2d.1} parent=5 // pred_check_branch
      %116 = sbr.rel (%p113) target = $region12
    $region11: #{avg_pool2d.1} parent=5 // pred_region
      %s117 = ssub.s32 %s9, 1
      // Predicated region
      $region13: #{avg_pool2d.1} parent=11 // pred_check
        %p118 = pneg %p56
      $region14: #{avg_pool2d.1} parent=11 // pred_check_branch
        %120 = sbr.rel (%p118) target = $region16
      $region15: #{avg_pool2d.1} parent=11 // pred_region
        _
      $region16: #{avg_pool2d.1} parent=11 // pred_fallthru
        _
      // Predicated region
      $region17: #{avg_pool2d.1} parent=11 // pred_check
        %p121 = pneg %p77
      $region18: #{avg_pool2d.1} parent=11 // pred_check_branch
        %123 = sbr.rel (%p121) target = $region20
      $region19: #{avg_pool2d.1} parent=11 // pred_region
        _
      $region20: #{avg_pool2d.1} parent=11 // pred_fallthru
        _
    $region12: #{avg_pool2d.1} parent=5 // pred_fallthru
      _
    %p124 = scmp.lt.s32.totalorder %s9, 2
    // Predicated region
    $region21: #{avg_pool2d.1} parent=5 // pred_check
      %p125 = pneg %p124
    $region22: #{avg_pool2d.1} parent=5 // pred_check_branch
      %127 = sbr.rel (%p125) target = $region24
    $region23: #{avg_pool2d.1} parent=5 // pred_region
      // Predicated region
      $region25: #{avg_pool2d.1} parent=23 // pred_check
        %p128 = pneg %p29
      $region26: #{avg_pool2d.1} parent=23 // pred_check_branch
        %130 = sbr.rel (%p128) target = $region28
      $region27: #{avg_pool2d.1} parent=23 // pred_region
        %p131 = scmp.lt.s32.totalorder %s9, 1
        %s132 = scalar_select %p131, %s9, 1
        %s133 = smul.addr %s132, 8
        %s134 = smul.addr %s133, 8
        %s135 = scalar_lea.vmem %s0, %s134
      $region28: #{avg_pool2d.1} parent=23 // pred_fallthru
        _
    $region24: #{avg_pool2d.1} parent=5 // pred_fallthru
      _
    %p136 = scmp.le.s32.totalorder 1, %s9
    %p137 = scmp.lt.s32.totalorder %s9, 3
    %p138 = pnand %p136, %p137
    %p139 = pneg %p138
    // Predicated region
    $region29: #{avg_pool2d.1} parent=5 // pred_check
      _
    $region30: #{avg_pool2d.1} parent=5 // pred_check_branch
      %141 = sbr.rel (%p138) target = $region32
    $region31: #{avg_pool2d.1} parent=5 // pred_region
      %s142 = ssub.s32 %s9, 1
      %p143 = scmp.lt.s32.totalorder %s14, 1
      %s144 = scalar_select %p143, %s14, 1
      %s145 = smul.addr %s144, 8
      %s146 = smul.addr %s145, 8
      %s147 = scalar_lea.vmem %s0, %s146
      %p148 = pneg %p35
      %p149 = pneg %p32
      %p150 = pneg %p56
      %p151 = pneg %p53
      %p152 = pneg %p77
      %p153 = pneg %p74
      %p154 = pneg %p103
      %p155 = pneg %p100
      %p156 = scmp.lt.s32.totalorder %s14, 1
      %s157 = scalar_select %p156, %s14, 1
      %s158 = smul.addr %s157, 5
      %s159 = smul.addr %s158, 8
      %s160 = scalar_lea.vmem %s3, %s159
      %p161 = scmp.lt.s32.totalorder %s14, 1
      %s162 = scalar_select %p161, %s14, 1
      %s163 = smul.addr %s162, 8
      %s164 = smul.addr %s163, 8
      %s165 = scalar_lea.vmem %s0, %s164
      %p166 = scmp.lt.s32.totalorder %s14, 1
      %s167 = scalar_select %p166, %s14, 1
      %s168 = smul.addr %s167, 5
      %s169 = smul.addr %s168, 8
      %s170 = scalar_lea.vmem %s3, %s169
      %v171 = vld [vmem:[%s165] sm:$0xff]
      %v172 = vld [vmem:[%s165 + $0x8] sm:$0xff]
      %v173 = vld [vmem:[%s165 + $0x10] sm:$0xff]
      %v174 = vld [vmem:[%s165 + $0x18] sm:$0xff]
      %v175 = vld [vmem:[%s165 + $0x20] sm:$0xff]
      %v176 = vld [vmem:[%s165 + $0x28] sm:$0xff]
      %v177 = vld [vmem:[%s165 + $0x30] sm:$0xff]
      %v178 = vld [vmem:[%s165 + $0x38] sm:$0xff]
      %v179 = vld [vmem:[%s1] sm:$0xff]
      %v180 = vld [vmem:[%s1 + $0x8] sm:$0xff]
      %vm181 = vcmask 130048
      %v183 = vsel %vm181, %v171, 0
      %v186 = vsel %vm181, %v172, 0
      %v189 = vsel %vm181, %v173, 0
      %v192 = vsel %vm181, %v174, 0
      %v195 = vsel %vm181, %v175, 0
      %v198 = vsel %vm181, %v176, 0
      %v201 = vsel %vm181, %v177, 0
      %v204 = vsel %vm181, %v178, 0
      %206 = vmatpush.msra.mxu0 0.0
      %207 = vmatpush.msra.mxu0 0.0
      %208 = vmatpush.msra.mxu0 0.0
      %209 = vmatpush.msra.mxu0 0.0
      %210 = vmatpush.msra.mxu0 0.0
      %211 = vmatpush.msra.mxu0 0.0
      %212 = vmatpush.msra.mxu0 0.0
      %213 = vmatpush.msra.mxu0 0.0
      %214 = vmatpush.msra.mxu0 0.0
      %215 = vmatpush.msra.mxu0 0.0
      %216 = vmatpush.msra.mxu0 0.0
      %217 = vmatpush.msra.mxu0 0.0
      %218 = vmatpush.msra.mxu0 0.0
      %219 = vmatpush.msra.mxu0 0.0
      %v220 = vand.u32 %v180, 4294901760
      %221 = vmatpush.msra.mxu0 %v220
      %v222 = vand.u32 %v179, 4294901760
      %223 = vmatpush.msra.mxu0 %v222
      %v224 = vand.u32 %v183, 4294901760
      %v225 = vsub.f32 %v183, %v224
      %v226 = vand.u32 %v225, 4294901760
      %v227 = vsub.f32 %v225, %v226
      %v228 = vand.u32 %v227, 4294901760
      %229 = vmatmul.f32.gmra.mxu0 %v228
      %v230 = vpop.f32.mrf.mxu0
      %v231 = vadd.f32 0.0, %v230
      %v232 = vand.u32 %v186, 4294901760
      %v233 = vsub.f32 %v186, %v232
      %v234 = vand.u32 %v233, 4294901760
      %v235 = vsub.f32 %v233, %v234
      %v236 = vand.u32 %v235, 4294901760
      %237 = vmatmul.f32.gmra.mxu0 %v236
      %v238 = vpop.f32.mrf.mxu0
      %v239 = vadd.f32 0.0, %v238
      %v240 = vand.u32 %v189, 4294901760
      %v241 = vsub.f32 %v189, %v240
      %v242 = vand.u32 %v241, 4294901760
      %v243 = vsub.f32 %v241, %v242
      %v244 = vand.u32 %v243, 4294901760
      %245 = vmatmul.f32.gmra.mxu0 %v244
      %v246 = vpop.f32.mrf.mxu0
      %v247 = vadd.f32 0.0, %v246
      %v248 = vand.u32 %v192, 4294901760
      %v249 = vsub.f32 %v192, %v248
      %v250 = vand.u32 %v249, 4294901760
      %v251 = vsub.f32 %v249, %v250
      %v252 = vand.u32 %v251, 4294901760
      %253 = vmatmul.f32.gmra.mxu0 %v252
      %v254 = vpop.f32.mrf.mxu0
      %v255 = vadd.f32 0.0, %v254
      %v256 = vand.u32 %v195, 4294901760
      %v257 = vsub.f32 %v195, %v256
      %v258 = vand.u32 %v257, 4294901760
      %v259 = vsub.f32 %v257, %v258
      %v260 = vand.u32 %v259, 4294901760
      %261 = vmatmul.f32.gmra.mxu0 %v260
      %v262 = vpop.f32.mrf.mxu0
      %v263 = vadd.f32 0.0, %v262
      %v264 = vand.u32 %v198, 4294901760
      %v265 = vsub.f32 %v198, %v264
      %v266 = vand.u32 %v265, 4294901760
      %v267 = vsub.f32 %v265, %v266
      %v268 = vand.u32 %v267, 4294901760
      %269 = vmatmul.f32.gmra.mxu0 %v268
      %v270 = vpop.f32.mrf.mxu0
      %v271 = vadd.f32 0.0, %v270
      %v272 = vand.u32 %v201, 4294901760
      %v273 = vsub.f32 %v201, %v272
      %v274 = vand.u32 %v273, 4294901760
      %v275 = vsub.f32 %v273, %v274
      %v276 = vand.u32 %v275, 4294901760
      %277 = vmatmul.f32.gmra.mxu0 %v276
      %v278 = vpop.f32.mrf.mxu0
      %v279 = vadd.f32 0.0, %v278
      %v280 = vand.u32 %v204, 4294901760
      %v281 = vsub.f32 %v204, %v280
      %v282 = vand.u32 %v281, 4294901760
      %v283 = vsub.f32 %v281, %v282
      %v284 = vand.u32 %v283, 4294901760
      %285 = vmatmul.f32.gmra.mxu0 %v284
      %v286 = vpop.f32.mrf.mxu0
      %v287 = vadd.f32 0.0, %v286
      %288 = vdwg.mxu0
      %289 = vmatpush.msra.mxu0 0.0
      %290 = vmatpush.msra.mxu0 0.0
      %291 = vmatpush.msra.mxu0 0.0
      %292 = vmatpush.msra.mxu0 0.0
      %293 = vmatpush.msra.mxu0 0.0
      %294 = vmatpush.msra.mxu0 0.0
      %295 = vmatpush.msra.mxu0 0.0
      %296 = vmatpush.msra.mxu0 0.0
      %297 = vmatpush.msra.mxu0 0.0
      %298 = vmatpush.msra.mxu0 0.0
      %299 = vmatpush.msra.mxu0 0.0
      %300 = vmatpush.msra.mxu0 0.0
      %301 = vmatpush.msra.mxu0 0.0
      %302 = vmatpush.msra.mxu0 0.0
      %v303 = vand.u32 %v180, 4294901760
      %v304 = vsub.f32 %v180, %v303
      %v305 = vand.u32 %v304, 4294901760
      %v306 = vsub.f32 %v304, %v305
      %v307 = vand.u32 %v306, 4294901760
      %308 = vmatpush.msra.mxu0 %v307
      %v309 = vand.u32 %v179, 4294901760
      %v310 = vsub.f32 %v179, %v309
      %v311 = vand.u32 %v310, 4294901760
      %v312 = vsub.f32 %v310, %v311
      %v313 = vand.u32 %v312, 4294901760
      %314 = vmatpush.msra.mxu0 %v313
      %v315 = vand.u32 %v183, 4294901760
      %316 = vmatmul.f32.gmra.mxu0 %v315
      %v317 = vpop.f32.mrf.mxu0
      %v318 = vadd.f32 %v231, %v317
      %v319 = vand.u32 %v186, 4294901760
      %320 = vmatmul.f32.gmra.mxu0 %v319
      %v321 = vpop.f32.mrf.mxu0
      %v322 = vadd.f32 %v239, %v321
      %v323 = vand.u32 %v189, 4294901760
      %324 = vmatmul.f32.gmra.mxu0 %v323
      %v325 = vpop.f32.mrf.mxu0
      %v326 = vadd.f32 %v247, %v325
      %v327 = vand.u32 %v192, 4294901760
      %328 = vmatmul.f32.gmra.mxu0 %v327
      %v329 = vpop.f32.mrf.mxu0
      %v330 = vadd.f32 %v255, %v329
      %v331 = vand.u32 %v195, 4294901760
      %332 = vmatmul.f32.gmra.mxu0 %v331
      %v333 = vpop.f32.mrf.mxu0
      %v334 = vadd.f32 %v263, %v333
      %v335 = vand.u32 %v198, 4294901760
      %336 = vmatmul.f32.gmra.mxu0 %v335
      %v337 = vpop.f32.mrf.mxu0
      %v338 = vadd.f32 %v271, %v337
      %v339 = vand.u32 %v201, 4294901760
      %340 = vmatmul.f32.gmra.mxu0 %v339
      %v341 = vpop.f32.mrf.mxu0
      %v342 = vadd.f32 %v279, %v341
      %v343 = vand.u32 %v204, 4294901760
      %344 = vmatmul.f32.gmra.mxu0 %v343
      %v345 = vpop.f32.mrf.mxu0
      %v346 = vadd.f32 %v287, %v345
      %347 = vdwg.mxu0
      %348 = vmatpush.msra.mxu0 0.0
      %349 = vmatpush.msra.mxu0 0.0
      %350 = vmatpush.msra.mxu0 0.0
      %351 = vmatpush.msra.mxu0 0.0
      %352 = vmatpush.msra.mxu0 0.0
      %353 = vmatpush.msra.mxu0 0.0
      %354 = vmatpush.msra.mxu0 0.0
      %355 = vmatpush.msra.mxu0 0.0
      %356 = vmatpush.msra.mxu0 0.0
      %357 = vmatpush.msra.mxu0 0.0
      %358 = vmatpush.msra.mxu0 0.0
      %359 = vmatpush.msra.mxu0 0.0
      %360 = vmatpush.msra.mxu0 0.0
      %361 = vmatpush.msra.mxu0 0.0
      %v362 = vand.u32 %v180, 4294901760
      %v363 = vsub.f32 %v180, %v362
      %364 = vmatpush.msra.mxu0 %v363
      %v365 = vand.u32 %v179, 4294901760
      %v366 = vsub.f32 %v179, %v365
      %367 = vmatpush.msra.mxu0 %v366
      %v368 = vand.u32 %v183, 4294901760
      %v369 = vsub.f32 %v183, %v368
      %370 = vmatmul.f32.gmra.mxu0 %v369
      %v371 = vpop.f32.mrf.mxu0
      %v372 = vadd.f32 %v318, %v371
      %v373 = vand.u32 %v186, 4294901760
      %v374 = vsub.f32 %v186, %v373
      %375 = vmatmul.f32.gmra.mxu0 %v374
      %v376 = vpop.f32.mrf.mxu0
      %v377 = vadd.f32 %v322, %v376
      %v378 = vand.u32 %v189, 4294901760
      %v379 = vsub.f32 %v189, %v378
      %380 = vmatmul.f32.gmra.mxu0 %v379
      %v381 = vpop.f32.mrf.mxu0
      %v382 = vadd.f32 %v326, %v381
      %v383 = vand.u32 %v192, 4294901760
      %v384 = vsub.f32 %v192, %v383
      %385 = vmatmul.f32.gmra.mxu0 %v384
      %v386 = vpop.f32.mrf.mxu0
      %v387 = vadd.f32 %v330, %v386
      %v388 = vand.u32 %v195, 4294901760
      %v389 = vsub.f32 %v195, %v388
      %390 = vmatmul.f32.gmra.mxu0 %v389
      %v391 = vpop.f32.mrf.mxu0
      %v392 = vadd.f32 %v334, %v391
      %v393 = vand.u32 %v198, 4294901760
      %v394 = vsub.f32 %v198, %v393
      %395 = vmatmul.f32.gmra.mxu0 %v394
      %v396 = vpop.f32.mrf.mxu0
      %v397 = vadd.f32 %v338, %v396
      %v398 = vand.u32 %v201, 4294901760
      %v399 = vsub.f32 %v201, %v398
      %400 = vmatmul.f32.gmra.mxu0 %v399
      %v401 = vpop.f32.mrf.mxu0
      %v402 = vadd.f32 %v342, %v401
      %v403 = vand.u32 %v204, 4294901760
      %v404 = vsub.f32 %v204, %v403
      %405 = vmatmul.f32.gmra.mxu0 %v404
      %v406 = vpop.f32.mrf.mxu0
      %v407 = vadd.f32 %v346, %v406
      %408 = vdwg.mxu0
      %409 = vmatpush.msra.mxu0 0.0
      %410 = vmatpush.msra.mxu0 0.0
      %411 = vmatpush.msra.mxu0 0.0
      %412 = vmatpush.msra.mxu0 0.0
      %413 = vmatpush.msra.mxu0 0.0
      %414 = vmatpush.msra.mxu0 0.0
      %415 = vmatpush.msra.mxu0 0.0
      %416 = vmatpush.msra.mxu0 0.0
      %417 = vmatpush.msra.mxu0 0.0
      %418 = vmatpush.msra.mxu0 0.0
      %419 = vmatpush.msra.mxu0 0.0
      %420 = vmatpush.msra.mxu0 0.0
      %421 = vmatpush.msra.mxu0 0.0
      %422 = vmatpush.msra.mxu0 0.0
      %v423 = vand.u32 %v180, 4294901760
      %424 = vmatpush.msra.mxu0 %v423
      %v425 = vand.u32 %v179, 4294901760
      %426 = vmatpush.msra.mxu0 %v425
      %v427 = vand.u32 %v183, 4294901760
      %v428 = vsub.f32 %v183, %v427
      %v429 = vand.u32 %v428, 4294901760
      %430 = vmatmul.f32.gmra.mxu0 %v429
      %v431 = vpop.f32.mrf.mxu0
      %v432 = vadd.f32 %v372, %v431
      %v433 = vand.u32 %v186, 4294901760
      %v434 = vsub.f32 %v186, %v433
      %v435 = vand.u32 %v434, 4294901760
      %436 = vmatmul.f32.gmra.mxu0 %v435
      %v437 = vpop.f32.mrf.mxu0
      %v438 = vadd.f32 %v377, %v437
      %v439 = vand.u32 %v189, 4294901760
      %v440 = vsub.f32 %v189, %v439
      %v441 = vand.u32 %v440, 4294901760
      %442 = vmatmul.f32.gmra.mxu0 %v441
      %v443 = vpop.f32.mrf.mxu0
      %v444 = vadd.f32 %v382, %v443
      %v445 = vand.u32 %v192, 4294901760
      %v446 = vsub.f32 %v192, %v445
      %v447 = vand.u32 %v446, 4294901760
      %448 = vmatmul.f32.gmra.mxu0 %v447
      %v449 = vpop.f32.mrf.mxu0
      %v450 = vadd.f32 %v387, %v449
      %v451 = vand.u32 %v195, 4294901760
      %v452 = vsub.f32 %v195, %v451
      %v453 = vand.u32 %v452, 4294901760
      %454 = vmatmul.f32.gmra.mxu0 %v453
      %v455 = vpop.f32.mrf.mxu0
      %v456 = vadd.f32 %v392, %v455
      %v457 = vand.u32 %v198, 4294901760
      %v458 = vsub.f32 %v198, %v457
      %v459 = vand.u32 %v458, 4294901760
      %460 = vmatmul.f32.gmra.mxu0 %v459
      %v461 = vpop.f32.mrf.mxu0
      %v462 = vadd.f32 %v397, %v461
      %v463 = vand.u32 %v201, 4294901760
      %v464 = vsub.f32 %v201, %v463
      %v465 = vand.u32 %v464, 4294901760
      %466 = vmatmul.f32.gmra.mxu0 %v465
      %v467 = vpop.f32.mrf.mxu0
      %v468 = vadd.f32 %v402, %v467
      %v469 = vand.u32 %v204, 4294901760
      %v470 = vsub.f32 %v204, %v469
      %v471 = vand.u32 %v470, 4294901760
      %472 = vmatmul.f32.gmra.mxu0 %v471
      %v473 = vpop.f32.mrf.mxu0
      %v474 = vadd.f32 %v407, %v473
      %475 = vdwg.mxu0
      %476 = vmatpush.msra.mxu0 0.0
      %477 = vmatpush.msra.mxu0 0.0
      %478 = vmatpush.msra.mxu0 0.0
      %479 = vmatpush.msra.mxu0 0.0
      %480 = vmatpush.msra.mxu0 0.0
      %481 = vmatpush.msra.mxu0 0.0
      %482 = vmatpush.msra.mxu0 0.0
      %483 = vmatpush.msra.mxu0 0.0
      %484 = vmatpush.msra.mxu0 0.0
      %485 = vmatpush.msra.mxu0 0.0
      %486 = vmatpush.msra.mxu0 0.0
      %487 = vmatpush.msra.mxu0 0.0
      %488 = vmatpush.msra.mxu0 0.0
      %489 = vmatpush.msra.mxu0 0.0
      %v490 = vand.u32 %v180, 4294901760
      %v491 = vsub.f32 %v180, %v490
      %v492 = vand.u32 %v491, 4294901760
      %493 = vmatpush.msra.mxu0 %v492
      %v494 = vand.u32 %v179, 4294901760
      %v495 = vsub.f32 %v179, %v494
      %v496 = vand.u32 %v495, 4294901760
      %497 = vmatpush.msra.mxu0 %v496
      %v498 = vand.u32 %v183, 4294901760
      %499 = vmatmul.f32.gmra.mxu0 %v498
      %v500 = vpop.f32.mrf.mxu0
      %v501 = vadd.f32 %v432, %v500
      %v502 = vand.u32 %v186, 4294901760
      %503 = vmatmul.f32.gmra.mxu0 %v502
      %v504 = vpop.f32.mrf.mxu0
      %v505 = vadd.f32 %v438, %v504
      %v506 = vand.u32 %v189, 4294901760
      %507 = vmatmul.f32.gmra.mxu0 %v506
      %v508 = vpop.f32.mrf.mxu0
      %v509 = vadd.f32 %v444, %v508
      %v510 = vand.u32 %v192, 4294901760
      %511 = vmatmul.f32.gmra.mxu0 %v510
      %v512 = vpop.f32.mrf.mxu0
      %v513 = vadd.f32 %v450, %v512
      %v514 = vand.u32 %v195, 4294901760
      %515 = vmatmul.f32.gmra.mxu0 %v514
      %v516 = vpop.f32.mrf.mxu0
      %v517 = vadd.f32 %v456, %v516
      %v518 = vand.u32 %v198, 4294901760
      %519 = vmatmul.f32.gmra.mxu0 %v518
      %v520 = vpop.f32.mrf.mxu0
      %v521 = vadd.f32 %v462, %v520
      %v522 = vand.u32 %v201, 4294901760
      %523 = vmatmul.f32.gmra.mxu0 %v522
      %v524 = vpop.f32.mrf.mxu0
      %v525 = vadd.f32 %v468, %v524
      %v526 = vand.u32 %v204, 4294901760
      %527 = vmatmul.f32.gmra.mxu0 %v526
      %v528 = vpop.f32.mrf.mxu0
      %v529 = vadd.f32 %v474, %v528
      %530 = vdwg.mxu0
      %531 = vmatpush.msra.mxu0 0.0
      %532 = vmatpush.msra.mxu0 0.0
      %533 = vmatpush.msra.mxu0 0.0
      %534 = vmatpush.msra.mxu0 0.0
      %535 = vmatpush.msra.mxu0 0.0
      %536 = vmatpush.msra.mxu0 0.0
      %537 = vmatpush.msra.mxu0 0.0
      %538 = vmatpush.msra.mxu0 0.0
      %539 = vmatpush.msra.mxu0 0.0
      %540 = vmatpush.msra.mxu0 0.0
      %541 = vmatpush.msra.mxu0 0.0
      %542 = vmatpush.msra.mxu0 0.0
      %543 = vmatpush.msra.mxu0 0.0
      %544 = vmatpush.msra.mxu0 0.0
      %v545 = vand.u32 %v180, 4294901760
      %546 = vmatpush.msra.mxu0 %v545
      %v547 = vand.u32 %v179, 4294901760
      %548 = vmatpush.msra.mxu0 %v547
      %v549 = vand.u32 %v183, 4294901760
      %550 = vmatmul.f32.gmra.mxu0 %v549
      %v551 = vpop.f32.mrf.mxu0
      %v552 = vadd.f32 %v501, %v551
      %v553 = vand.u32 %v186, 4294901760
      %554 = vmatmul.f32.gmra.mxu0 %v553
      %v555 = vpop.f32.mrf.mxu0
      %v556 = vadd.f32 %v505, %v555
      %v557 = vand.u32 %v189, 4294901760
      %558 = vmatmul.f32.gmra.mxu0 %v557
      %v559 = vpop.f32.mrf.mxu0
      %v560 = vadd.f32 %v509, %v559
      %v561 = vand.u32 %v192, 4294901760
      %562 = vmatmul.f32.gmra.mxu0 %v561
      %v563 = vpop.f32.mrf.mxu0
      %v564 = vadd.f32 %v513, %v563
      %v565 = vand.u32 %v195, 4294901760
      %566 = vmatmul.f32.gmra.mxu0 %v565
      %v567 = vpop.f32.mrf.mxu0
      %v568 = vadd.f32 %v517, %v567
      %v569 = vand.u32 %v198, 4294901760
      %570 = vmatmul.f32.gmra.mxu0 %v569
      %v571 = vpop.f32.mrf.mxu0
      %v572 = vadd.f32 %v521, %v571
      %v573 = vand.u32 %v201, 4294901760
      %574 = vmatmul.f32.gmra.mxu0 %v573
      %v575 = vpop.f32.mrf.mxu0
      %v576 = vadd.f32 %v525, %v575
      %v577 = vand.u32 %v204, 4294901760
      %578 = vmatmul.f32.gmra.mxu0 %v577
      %v579 = vpop.f32.mrf.mxu0
      %v580 = vadd.f32 %v529, %v579
      %581 = vdwg.mxu0
      %v582 = vld [vmem:[%s2] sm:$0xff]
      %v583 = vld [vmem:[%s2 + $0x8] sm:$0xff]
      %v584 = vld [vmem:[%s2 + $0x10] sm:$0xff]
      %v585 = vld [vmem:[%s2 + $0x18] sm:$0xff]
      %v586 = vld [vmem:[%s2 + $0x20] sm:$0xf]
      %vm587 = vcmask 523264
      %v589 = vsel %vm587, %v582, 0
      %v592 = vsel %vm587, %v583, 0
      %v595 = vsel %vm587, %v584, 0
      %v598 = vsel %vm587, %v585, 0
      %v601 = vsel %vm587, %v586, 0
      %603 = vmatpush.msra.mxu0 0.0
      %604 = vmatpush.msra.mxu0 0.0
      %605 = vmatpush.msra.mxu0 0.0
      %606 = vmatpush.msra.mxu0 0.0
      %607 = vmatpush.msra.mxu0 0.0
      %608 = vmatpush.msra.mxu0 0.0
      %609 = vmatpush.msra.mxu0 0.0
      %610 = vmatpush.msra.mxu0 0.0
      %v611 = vand.u32 %v580, 4294901760
      %612 = vmatpush.msra.mxu0 %v611
      %v613 = vand.u32 %v576, 4294901760
      %614 = vmatpush.msra.mxu0 %v613
      %v615 = vand.u32 %v572, 4294901760
      %616 = vmatpush.msra.mxu0 %v615
      %v617 = vand.u32 %v568, 4294901760
      %618 = vmatpush.msra.mxu0 %v617
      %v619 = vand.u32 %v564, 4294901760
      %620 = vmatpush.msra.mxu0 %v619
      %v621 = vand.u32 %v560, 4294901760
      %622 = vmatpush.msra.mxu0 %v621
      %v623 = vand.u32 %v556, 4294901760
      %624 = vmatpush.msra.mxu0 %v623
      %v625 = vand.u32 %v552, 4294901760
      %626 = vmatpush.msra.mxu0 %v625
      %v627 = vand.u32 %v589, 4294901760
      %v628 = vsub.f32 %v589, %v627
      %v629 = vand.u32 %v628, 4294901760
      %v630 = vsub.f32 %v628, %v629
      %v631 = vand.u32 %v630, 4294901760
      %632 = vmatmul.f32.gmra.mxu0 %v631
      %v633 = vpop.f32.mrf.mxu0
      %v634 = vadd.f32 0.0, %v633
      %v635 = vand.u32 %v592, 4294901760
      %v636 = vsub.f32 %v592, %v635
      %v637 = vand.u32 %v636, 4294901760
      %v638 = vsub.f32 %v636, %v637
      %v639 = vand.u32 %v638, 4294901760
      %640 = vmatmul.f32.gmra.mxu0 %v639
      %v641 = vpop.f32.mrf.mxu0
      %v642 = vadd.f32 0.0, %v641
      %v643 = vand.u32 %v595, 4294901760
      %v644 = vsub.f32 %v595, %v643
      %v645 = vand.u32 %v644, 4294901760
      %v646 = vsub.f32 %v644, %v645
      %v647 = vand.u32 %v646, 4294901760
      %648 = vmatmul.f32.gmra.mxu0 %v647
      %v649 = vpop.f32.mrf.mxu0
      %v650 = vadd.f32 0.0, %v649
      %v651 = vand.u32 %v598, 4294901760
      %v652 = vsub.f32 %v598, %v651
      %v653 = vand.u32 %v652, 4294901760
      %v654 = vsub.f32 %v652, %v653
      %v655 = vand.u32 %v654, 4294901760
      %656 = vmatmul.f32.gmra.mxu0 %v655
      %v657 = vpop.f32.mrf.mxu0
      %v658 = vadd.f32 0.0, %v657
      %v659 = vand.u32 %v601, 4294901760
      %v660 = vsub.f32 %v601, %v659
      %v661 = vand.u32 %v660, 4294901760
      %v662 = vsub.f32 %v660, %v661
      %v663 = vand.u32 %v662, 4294901760
      %664 = vmatmul.f32.gmra.mxu0 %v663
      %v665 = vpop.f32.mrf.mxu0
      %v666 = vadd.f32 0.0, %v665
      %667 = vdwg.mxu0
      %668 = vmatpush.msra.mxu0 0.0
      %669 = vmatpush.msra.mxu0 0.0
      %670 = vmatpush.msra.mxu0 0.0
      %671 = vmatpush.msra.mxu0 0.0
      %672 = vmatpush.msra.mxu0 0.0
      %673 = vmatpush.msra.mxu0 0.0
      %674 = vmatpush.msra.mxu0 0.0
      %675 = vmatpush.msra.mxu0 0.0
      %v676 = vand.u32 %v580, 4294901760
      %v677 = vsub.f32 %v580, %v676
      %v678 = vand.u32 %v677, 4294901760
      %v679 = vsub.f32 %v677, %v678
      %v680 = vand.u32 %v679, 4294901760
      %681 = vmatpush.msra.mxu0 %v680
      %v682 = vand.u32 %v576, 4294901760
      %v683 = vsub.f32 %v576, %v682
      %v684 = vand.u32 %v683, 4294901760
      %v685 = vsub.f32 %v683, %v684
      %v686 = vand.u32 %v685, 4294901760
      %687 = vmatpush.msra.mxu0 %v686
      %v688 = vand.u32 %v572, 4294901760
      %v689 = vsub.f32 %v572, %v688
      %v690 = vand.u32 %v689, 4294901760
      %v691 = vsub.f32 %v689, %v690
      %v692 = vand.u32 %v691, 4294901760
      %693 = vmatpush.msra.mxu0 %v692
      %v694 = vand.u32 %v568, 4294901760
      %v695 = vsub.f32 %v568, %v694
      %v696 = vand.u32 %v695, 4294901760
      %v697 = vsub.f32 %v695, %v696
      %v698 = vand.u32 %v697, 4294901760
      %699 = vmatpush.msra.mxu0 %v698
      %v700 = vand.u32 %v564, 4294901760
      %v701 = vsub.f32 %v564, %v700
      %v702 = vand.u32 %v701, 4294901760
      %v703 = vsub.f32 %v701, %v702
      %v704 = vand.u32 %v703, 4294901760
      %705 = vmatpush.msra.mxu0 %v704
      %v706 = vand.u32 %v560, 4294901760
      %v707 = vsub.f32 %v560, %v706
      %v708 = vand.u32 %v707, 4294901760
      %v709 = vsub.f32 %v707, %v708
      %v710 = vand.u32 %v709, 4294901760
      %711 = vmatpush.msra.mxu0 %v710
      %v712 = vand.u32 %v556, 4294901760
      %v713 = vsub.f32 %v556, %v712
      %v714 = vand.u32 %v713, 4294901760
      %v715 = vsub.f32 %v713, %v714
      %v716 = vand.u32 %v715, 4294901760
      %717 = vmatpush.msra.mxu0 %v716
      %v718 = vand.u32 %v552, 4294901760
      %v719 = vsub.f32 %v552, %v718
      %v720 = vand.u32 %v719, 4294901760
      %v721 = vsub.f32 %v719, %v720
      %v722 = vand.u32 %v721, 4294901760
      %723 = vmatpush.msra.mxu0 %v722
      %v724 = vand.u32 %v589, 4294901760
      %725 = vmatmul.f32.gmra.mxu0 %v724
      %v726 = vpop.f32.mrf.mxu0
      %v727 = vadd.f32 %v634, %v726
      %v728 = vand.u32 %v592, 4294901760
      %729 = vmatmul.f32.gmra.mxu0 %v728
      %v730 = vpop.f32.mrf.mxu0
      %v731 = vadd.f32 %v642, %v730
      %v732 = vand.u32 %v595, 4294901760
      %733 = vmatmul.f32.gmra.mxu0 %v732
      %v734 = vpop.f32.mrf.mxu0
      %v735 = vadd.f32 %v650, %v734
      %v736 = vand.u32 %v598, 4294901760
      %737 = vmatmul.f32.gmra.mxu0 %v736
      %v738 = vpop.f32.mrf.mxu0
      %v739 = vadd.f32 %v658, %v738
      %v740 = vand.u32 %v601, 4294901760
      %741 = vmatmul.f32.gmra.mxu0 %v740
      %v742 = vpop.f32.mrf.mxu0
      %v743 = vadd.f32 %v666, %v742
      %744 = vdwg.mxu0
      %745 = vmatpush.msra.mxu0 0.0
      %746 = vmatpush.msra.mxu0 0.0
      %747 = vmatpush.msra.mxu0 0.0
      %748 = vmatpush.msra.mxu0 0.0
      %749 = vmatpush.msra.mxu0 0.0
      %750 = vmatpush.msra.mxu0 0.0
      %751 = vmatpush.msra.mxu0 0.0
      %752 = vmatpush.msra.mxu0 0.0
      %v753 = vand.u32 %v580, 4294901760
      %v754 = vsub.f32 %v580, %v753
      %755 = vmatpush.msra.mxu0 %v754
      %v756 = vand.u32 %v576, 4294901760
      %v757 = vsub.f32 %v576, %v756
      %758 = vmatpush.msra.mxu0 %v757
      %v759 = vand.u32 %v572, 4294901760
      %v760 = vsub.f32 %v572, %v759
      %761 = vmatpush.msra.mxu0 %v760
      %v762 = vand.u32 %v568, 4294901760
      %v763 = vsub.f32 %v568, %v762
      %764 = vmatpush.msra.mxu0 %v763
      %v765 = vand.u32 %v564, 4294901760
      %v766 = vsub.f32 %v564, %v765
      %767 = vmatpush.msra.mxu0 %v766
      %v768 = vand.u32 %v560, 4294901760
      %v769 = vsub.f32 %v560, %v768
      %770 = vmatpush.msra.mxu0 %v769
      %v771 = vand.u32 %v556, 4294901760
      %v772 = vsub.f32 %v556, %v771
      %773 = vmatpush.msra.mxu0 %v772
      %v774 = vand.u32 %v552, 4294901760
      %v775 = vsub.f32 %v552, %v774
      %776 = vmatpush.msra.mxu0 %v775
      %v777 = vand.u32 %v589, 4294901760
      %v778 = vsub.f32 %v589, %v777
      %779 = vmatmul.f32.gmra.mxu0 %v778
      %v780 = vpop.f32.mrf.mxu0
      %v781 = vadd.f32 %v727, %v780
      %v782 = vand.u32 %v592, 4294901760
      %v783 = vsub.f32 %v592, %v782
      %784 = vmatmul.f32.gmra.mxu0 %v783
      %v785 = vpop.f32.mrf.mxu0
      %v786 = vadd.f32 %v731, %v785
      %v787 = vand.u32 %v595, 4294901760
      %v788 = vsub.f32 %v595, %v787
      %789 = vmatmul.f32.gmra.mxu0 %v788
      %v790 = vpop.f32.mrf.mxu0
      %v791 = vadd.f32 %v735, %v790
      %v792 = vand.u32 %v598, 4294901760
      %v793 = vsub.f32 %v598, %v792
      %794 = vmatmul.f32.gmra.mxu0 %v793
      %v795 = vpop.f32.mrf.mxu0
      %v796 = vadd.f32 %v739, %v795
      %v797 = vand.u32 %v601, 4294901760
      %v798 = vsub.f32 %v601, %v797
      %799 = vmatmul.f32.gmra.mxu0 %v798
      %v800 = vpop.f32.mrf.mxu0
      %v801 = vadd.f32 %v743, %v800
      %802 = vdwg.mxu0
      %803 = vmatpush.msra.mxu0 0.0
      %804 = vmatpush.msra.mxu0 0.0
      %805 = vmatpush.msra.mxu0 0.0
      %806 = vmatpush.msra.mxu0 0.0
      %807 = vmatpush.msra.mxu0 0.0
      %808 = vmatpush.msra.mxu0 0.0
      %809 = vmatpush.msra.mxu0 0.0
      %810 = vmatpush.msra.mxu0 0.0
      %v811 = vand.u32 %v580, 4294901760
      %812 = vmatpush.msra.mxu0 %v811
      %v813 = vand.u32 %v576, 4294901760
      %814 = vmatpush.msra.mxu0 %v813
      %v815 = vand.u32 %v572, 4294901760
      %816 = vmatpush.msra.mxu0 %v815
      %v817 = vand.u32 %v568, 4294901760
      %818 = vmatpush.msra.mxu0 %v817
      %v819 = vand.u32 %v564, 4294901760
      %820 = vmatpush.msra.mxu0 %v819
      %v821 = vand.u32 %v560, 4294901760
      %822 = vmatpush.msra.mxu0 %v821
      %v823 = vand.u32 %v556, 4294901760
      %824 = vmatpush.msra.mxu0 %v823
      %v825 = vand.u32 %v552, 4294901760
      %826 = vmatpush.msra.mxu0 %v825
      %v827 = vand.u32 %v589, 4294901760
      %v828 = vsub.f32 %v589, %v827
      %v829 = vand.u32 %v828, 4294901760
      %830 = vmatmul.f32.gmra.mxu0 %v829
      %v831 = vpop.f32.mrf.mxu0
      %v832 = vadd.f32 %v781, %v831
      %v833 = vand.u32 %v592, 4294901760
      %v834 = vsub.f32 %v592, %v833
      %v835 = vand.u32 %v834, 4294901760
      %836 = vmatmul.f32.gmra.mxu0 %v835
      %v837 = vpop.f32.mrf.mxu0
      %v838 = vadd.f32 %v786, %v837
      %v839 = vand.u32 %v595, 4294901760
      %v840 = vsub.f32 %v595, %v839
      %v841 = vand.u32 %v840, 4294901760
      %842 = vmatmul.f32.gmra.mxu0 %v841
      %v843 = vpop.f32.mrf.mxu0
      %v844 = vadd.f32 %v791, %v843
      %v845 = vand.u32 %v598, 4294901760
      %v846 = vsub.f32 %v598, %v845
      %v847 = vand.u32 %v846, 4294901760
      %848 = vmatmul.f32.gmra.mxu0 %v847
      %v849 = vpop.f32.mrf.mxu0
      %v850 = vadd.f32 %v796, %v849
      %v851 = vand.u32 %v601, 4294901760
      %v852 = vsub.f32 %v601, %v851
      %v853 = vand.u32 %v852, 4294901760
      %854 = vmatmul.f32.gmra.mxu0 %v853
      %v855 = vpop.f32.mrf.mxu0
      %v856 = vadd.f32 %v801, %v855
      %857 = vdwg.mxu0
      %858 = vmatpush.msra.mxu0 0.0
      %859 = vmatpush.msra.mxu0 0.0
      %860 = vmatpush.msra.mxu0 0.0
      %861 = vmatpush.msra.mxu0 0.0
      %862 = vmatpush.msra.mxu0 0.0
      %863 = vmatpush.msra.mxu0 0.0
      %864 = vmatpush.msra.mxu0 0.0
      %865 = vmatpush.msra.mxu0 0.0
      %v866 = vand.u32 %v580, 4294901760
      %v867 = vsub.f32 %v580, %v866
      %v868 = vand.u32 %v867, 4294901760
      %869 = vmatpush.msra.mxu0 %v868
      %v870 = vand.u32 %v576, 4294901760
      %v871 = vsub.f32 %v576, %v870
      %v872 = vand.u32 %v871, 4294901760
      %873 = vmatpush.msra.mxu0 %v872
      %v874 = vand.u32 %v572, 4294901760
      %v875 = vsub.f32 %v572, %v874
      %v876 = vand.u32 %v875, 4294901760
      %877 = vmatpush.msra.mxu0 %v876
      %v878 = vand.u32 %v568, 4294901760
      %v879 = vsub.f32 %v568, %v878
      %v880 = vand.u32 %v879, 4294901760
      %881 = vmatpush.msra.mxu0 %v880
      %v882 = vand.u32 %v564, 4294901760
      %v883 = vsub.f32 %v564, %v882
      %v884 = vand.u32 %v883, 4294901760
      %885 = vmatpush.msra.mxu0 %v884
      %v886 = vand.u32 %v560, 4294901760
      %v887 = vsub.f32 %v560, %v886
      %v888 = vand.u32 %v887, 4294901760
      %889 = vmatpush.msra.mxu0 %v888
      %v890 = vand.u32 %v556, 4294901760
      %v891 = vsub.f32 %v556, %v890
      %v892 = vand.u32 %v891, 4294901760
      %893 = vmatpush.msra.mxu0 %v892
      %v894 = vand.u32 %v552, 4294901760
      %v895 = vsub.f32 %v552, %v894
      %v896 = vand.u32 %v895, 4294901760
      %897 = vmatpush.msra.mxu0 %v896
      %v898 = vand.u32 %v589, 4294901760
      %899 = vmatmul.f32.gmra.mxu0 %v898
      %v900 = vpop.f32.mrf.mxu0
      %v901 = vadd.f32 %v832, %v900
      %v902 = vand.u32 %v592, 4294901760
      %903 = vmatmul.f32.gmra.mxu0 %v902
      %v904 = vpop.f32.mrf.mxu0
      %v905 = vadd.f32 %v838, %v904
      %v906 = vand.u32 %v595, 4294901760
      %907 = vmatmul.f32.gmra.mxu0 %v906
      %v908 = vpop.f32.mrf.mxu0
      %v909 = vadd.f32 %v844, %v908
      %v910 = vand.u32 %v598, 4294901760
      %911 = vmatmul.f32.gmra.mxu0 %v910
      %v912 = vpop.f32.mrf.mxu0
      %v913 = vadd.f32 %v850, %v912
      %v914 = vand.u32 %v601, 4294901760
      %915 = vmatmul.f32.gmra.mxu0 %v914
      %v916 = vpop.f32.mrf.mxu0
      %v917 = vadd.f32 %v856, %v916
      %918 = vdwg.mxu0
      %919 = vmatpush.msra.mxu0 0.0
      %920 = vmatpush.msra.mxu0 0.0
      %921 = vmatpush.msra.mxu0 0.0
      %922 = vmatpush.msra.mxu0 0.0
      %923 = vmatpush.msra.mxu0 0.0
      %924 = vmatpush.msra.mxu0 0.0
      %925 = vmatpush.msra.mxu0 0.0
      %926 = vmatpush.msra.mxu0 0.0
      %v927 = vand.u32 %v580, 4294901760
      %928 = vmatpush.msra.mxu0 %v927
      %v929 = vand.u32 %v576, 4294901760
      %930 = vmatpush.msra.mxu0 %v929
      %v931 = vand.u32 %v572, 4294901760
      %932 = vmatpush.msra.mxu0 %v931
      %v933 = vand.u32 %v568, 4294901760
      %934 = vmatpush.msra.mxu0 %v933
      %v935 = vand.u32 %v564, 4294901760
      %936 = vmatpush.msra.mxu0 %v935
      %v937 = vand.u32 %v560, 4294901760
      %938 = vmatpush.msra.mxu0 %v937
      %v939 = vand.u32 %v556, 4294901760
      %940 = vmatpush.msra.mxu0 %v939
      %v941 = vand.u32 %v552, 4294901760
      %942 = vmatpush.msra.mxu0 %v941
      %v943 = vand.u32 %v589, 4294901760
      %944 = vmatmul.f32.gmra.mxu0 %v943
      %v945 = vpop.f32.mrf.mxu0
      %v946 = vadd.f32 %v901, %v945
      %v947 = vand.u32 %v592, 4294901760
      %948 = vmatmul.f32.gmra.mxu0 %v947
      %v949 = vpop.f32.mrf.mxu0
      %v950 = vadd.f32 %v905, %v949
      %v951 = vand.u32 %v595, 4294901760
      %952 = vmatmul.f32.gmra.mxu0 %v951
      %v953 = vpop.f32.mrf.mxu0
      %v954 = vadd.f32 %v909, %v953
      %v955 = vand.u32 %v598, 4294901760
      %956 = vmatmul.f32.gmra.mxu0 %v955
      %v957 = vpop.f32.mrf.mxu0
      %v958 = vadd.f32 %v913, %v957
      %v959 = vand.u32 %v601, 4294901760
      %960 = vmatmul.f32.gmra.mxu0 %v959
      %v961 = vpop.f32.mrf.mxu0
      %v962 = vadd.f32 %v917, %v961
      %963 = vdwg.mxu0
      %v964 = vmul.f32 %v946, 0.020833334
      %v965 = vmul.f32 %v950, 0.020833334
      %v966 = vmul.f32 %v954, 0.020833334
      %v967 = vmul.f32 %v958, 0.020833334
      %v968 = vmul.f32 %v962, 0.020833334
      %vm969 = vcmask 72704
      %970 = vst.msk [vmem:[%s170] sm:$0xff] %vm969, %v964
      %971 = vst.msk [vmem:[%s170 + $0x8] sm:$0xff] %vm969, %v965
      %972 = vst.msk [vmem:[%s170 + $0x10] sm:$0xff] %vm969, %v966
      %973 = vst.msk [vmem:[%s170 + $0x18] sm:$0xff] %vm969, %v967
      %vm974 = vcmask 68608
      %975 = vst.msk [vmem:[%s170 + $0x20] sm:$0xf] %vm974, %v968
      %p976 = scmp.lt.s32.totalorder %s14, 1
      %s977 = scalar_select %p976, %s14, 1
      %s978 = smul.addr %s977, 5
      %s979 = smul.addr %s978, 8
      %s980 = scalar_lea.vmem %s3, %s979
      // Predicated region
      $region33: #{avg_pool2d.1} parent=31 // pred_check
        %p981 = pneg %p100
      $region34: #{avg_pool2d.1} parent=31 // pred_check_branch
        %983 = sbr.rel (%p981) target = $region36
      $region35: #{avg_pool2d.1} parent=31 // pred_region
        _
      $region36: #{avg_pool2d.1} parent=31 // pred_fallthru
        _
    $region32: #{avg_pool2d.1} parent=5 // pred_fallthru
      _
    %p984 = scmp.le.s32.totalorder 2, %s9
    // Predicated region
    $region37: #{avg_pool2d.1} parent=5 // pred_check
      %p985 = pneg %p984
    $region38: #{avg_pool2d.1} parent=5 // pred_check_branch
      %987 = sbr.rel (%p985) target = $region40
    $region39: #{avg_pool2d.1} parent=5 // pred_region
      %s988 = ssub.s32 %s9, 2
      // Predicated region
      $region41: #{avg_pool2d.1} parent=39 // pred_check
        %p989 = pneg %p106
      $region42: #{avg_pool2d.1} parent=39 // pred_check_branch
        %991 = sbr.rel (%p989) target = $region44
      $region43: #{avg_pool2d.1} parent=39 // pred_region
        %p992 = scmp.lt.s32.totalorder %s15, 1
        %s993 = scalar_select %p992, %s15, 1
        %s994 = smul.addr %s993, 5
        %s995 = smul.addr %s994, 8
        %s996 = scalar_lea.vmem %s3, %s995
      $region44: #{avg_pool2d.1} parent=39 // pred_fallthru
        _
    $region40: #{avg_pool2d.1} parent=5 // pred_fallthru
      _
  $region6: #{avg_pool2d.1} parent=0 // loop_footer
    %s13 = sadd.s32 1, %s9
  $region7: #{avg_pool2d.1} parent=0 // loop_footer_branch
    %8 = sbr.rel target = $region3
  $region8: #{avg_pool2d.1} parent=0 // loop_exit
    _

</llo_original>
